<compile_context>
chip_gen: v6e
topology: v6e:2x2x1
jax: 0.10.0
libtpu: 0.0.40
codegen_flags: <defaults>
</compile_context>

<pallas_src>
import functools

import jax
import jax.numpy as jnp
from jax.experimental import pallas as pl
from jax.experimental.pallas import tpu as pltpu


def _round_up(x, m):
    return ((x + m - 1) // m) * m


def edge_mlp_kernel(x_ref, w1_ref, b1_ref, w2_ref, b2_ref, m_ref, o_ref):
    """Fused 2-layer edge MLP for one row-tile of edges.

    x_ref  : (TM, D_in)  tile of edge features (native dtype, no padding)
    w1,b1  : (D_in, H1), (1, H1)   layer-1 params (resident across the grid)
    w2,b2  : (H1, H2),  (1, H2)    layer-2 params (resident across the grid)
    m_ref  : (TM, 1)     bf16 row mask (1 keep / 0 drop)
    o_ref  : (TM, H2)    output tile
    """
    # Layer 1: Linear + ReLU   (Dropout == identity at inference)
    h = jnp.dot(x_ref[...], w1_ref[...],
                preferred_element_type=jnp.float32) + b1_ref[...]
    h = jnp.maximum(h, 0.0)
    # Layer 2: Linear + ReLU  (cast the f32 accumulator to the weight dtype so
    # the MXU runs bf16 when the data stream is bf16).
    y = jnp.dot(h.astype(w2_ref.dtype), w2_ref[...],
                preferred_element_type=jnp.float32) + b2_ref[...]
    y = jnp.maximum(y, 0.0)
    # mask_edge scatter semantics: zero out non-selected rows.
    o_ref[...] = (y * m_ref[...].astype(jnp.float32)).astype(o_ref.dtype)


@functools.partial(jax.jit, static_argnames=("tile_m",))
def embed_edge_forward(edge_attr, w1, b1, w2, b2, mask_edge=None, tile_m=None):
    """Pallas-backed equivalent of the MetaLayer edge-model forward (eval).

    The data stream dtype is edge_attr.dtype (f32 or bf16); no extra HBM
    passes are added in the wrapper.  Output dtype matches edge_attr.dtype.
    """
    E, D_in = edge_attr.shape
    H1 = w1.shape[1]
    H2 = w2.shape[1]
    out_dtype = edge_attr.dtype

    # ---- tile sizing: aim for >= 8 grid steps (v7x megacore + pipelining),
    #      cap at 1024 rows/tile, round to 16 sublanes (bf16-safe). ----------
    if tile_m is None:
        tile_m = max(16, min(1024, _round_up(-(-E // 8), 16)))
    num_tiles = pl.cdiv(E, tile_m)

    # Tiny parameter arrays: cast weights to the data-stream dtype (native MXU
    # width when bf16); keep biases f32 for the f32 accumulator.
    w1c = w1.astype(out_dtype)
    w2c = w2.astype(out_dtype)
    b1r = b1.reshape(1, H1).astype(jnp.float32)
    b2r = b2.reshape(1, H2).astype(jnp.float32)

    # Row mask (1 keep / 0 drop); bf16 halves the lane-padded VMEM buffers.
    if mask_edge is None:
        mask_f = jnp.ones((E, 1), jnp.bfloat16)
    else:
        mask_f = mask_edge.reshape(E, 1).astype(jnp.bfloat16)

    return pl.pallas_call(
        edge_mlp_kernel,
        out_shape=jax.ShapeDtypeStruct((E, H2), out_dtype),
        grid=(num_tiles,),
        in_specs=[
            pl.BlockSpec((tile_m, D_in), lambda i: (i, 0)),  # x (full last dim)
            pl.BlockSpec((D_in, H1),     lambda i: (0, 0)),  # W1 (resident)
            pl.BlockSpec((1, H1),        lambda i: (0, 0)),  # b1
            pl.BlockSpec((H1, H2),       lambda i: (0, 0)),  # W2
            pl.BlockSpec((1, H2),        lambda i: (0, 0)),  # b2
            pl.BlockSpec((tile_m, 1),    lambda i: (i, 0)),  # row mask
        ],
        out_specs=pl.BlockSpec((tile_m, H2), lambda i: (i, 0)),
        compiler_params=pltpu.CompilerParams(
            dimension_semantics=("parallel",)),
    )(edge_attr, w1c, b1r, w2c, b2r, mask_f)


def init_linear(key, fan_in, fan_out):
    """Deterministic stand-in for torch.nn.Linear.reset_parameters."""
    kw, kb = jax.random.split(key)
    limit_w = jnp.sqrt(6.0 / fan_in)          # kaiming_uniform(a=sqrt(5)) bound
    limit_b = 1.0 / jnp.sqrt(fan_in)
    w = jax.random.uniform(kw, (fan_in, fan_out), jnp.float32, -limit_w, limit_w)
    b = jax.random.uniform(kb, (1, fan_out), jnp.float32, -limit_b, limit_b)
    return w, b


def reference_forward(edge_attr, w1, b1, w2, b2, mask_edge=None):
    """Pure-JAX reference (mirrors the PyTorch gather->MLP->scatter path)."""
    if mask_edge is not None:
        x = edge_attr[mask_edge]
    else:
        x = edge_attr
    h = jnp.maximum(x @ w1 + b1, 0.0)
    y = jnp.maximum(h @ w2 + b2, 0.0)
    if mask_edge is not None:
        out = jnp.zeros((edge_attr.shape[0], y.shape[1]), y.dtype)
        out = out.at[jnp.nonzero(mask_edge)[0]].set(y)
        return out
    return y


if __name__ == "__main__":
    key = jax.random.PRNGKey(0)
    k_x, k_l1, k_l2, k_m = jax.random.split(key, 4)

    # Edge-model config: input_dim_e=82, e_mlp=[64, 32], act=ReLU.
    E = 250            # deliberately ragged (not a multiple of 8 / 128)
    input_dim_e = 82
    e_mlp = [64, 32]

    edge_attr = jax.random.normal(k_x, (E, input_dim_e), jnp.float32)
    w1, b1 = init_linear(k_l1, input_dim_e, e_mlp[0])
    w2, b2 = init_linear(k_l2, e_mlp[0], e_mlp[1])

    # Deterministic boolean edge mask (~half the edges selected).
    mask_edge = jax.random.bernoulli(k_m, 0.5, (E,))

    # f32 data-stream path (matches the reference closely).
    out_masked = embed_edge_forward(edge_attr, w1, b1, w2, b2, mask_edge)
    out_plain = embed_edge_forward(edge_attr, w1, b1, w2, b2, None)
    jax.block_until_ready(out_masked)
    jax.block_until_ready(out_plain)

    ref_masked = reference_forward(edge_attr, w1, b1, w2, b2, mask_edge)
    ref_plain = reference_forward(edge_attr, w1, b1, w2, b2, None)
    assert out_masked.shape == (E, e_mlp[1])
    assert out_masked.dtype == edge_attr.dtype
    assert jnp.allclose(out_masked, ref_masked, atol=2e-5, rtol=2e-5)
    assert jnp.allclose(out_plain, ref_plain, atol=2e-5, rtol=2e-5)

    # bf16 data-stream path (recommended default on v5e/v6e/v7x when the
    # producer emits bf16): same kernel, no wrapper pad/cast passes, bf16 out.
    edge_attr_bf16 = edge_attr.astype(jnp.bfloat16)
    out_bf16 = embed_edge_forward(edge_attr_bf16, w1, b1, w2, b2, mask_edge)
    jax.block_until_ready(out_bf16)
    assert out_bf16.dtype == jnp.bfloat16
    assert jnp.allclose(out_bf16.astype(jnp.float32), ref_masked,
                        atol=2e-1, rtol=1e-1)

    print("KERNEL_OK")
</pallas_src>

<mosaic_0001>
module attributes {stable_mosaic.version = 11 : i64} {
  func.func @edge_mlp_kernel(%arg0: i32, %arg1: memref<32x82xf32, #tpu.memory_space<vmem>>, %arg2: memref<82x64xf32, #tpu.memory_space<vmem>>, %arg3: memref<1x64xf32, #tpu.memory_space<vmem>>, %arg4: memref<64x32xf32, #tpu.memory_space<vmem>>, %arg5: memref<1x32xf32, #tpu.memory_space<vmem>>, %arg6: memref<32x1xbf16, #tpu.memory_space<vmem>>, %arg7: memref<32x32xf32, #tpu.memory_space<vmem>>) attributes {dimension_semantics = [#tpu.dimension_semantics<parallel>], iteration_bounds = array<i64: 8>, scalar_prefetch = 0 : i64, scratch_operands = 0 : i64, tpu.core_type = #tpu.core_type<tc>, window_params = [{transform_indices = @transform_0, window_bounds = array<i64: 32, 82>}, {pipeline_mode = #tpu.pipeline_mode<synchronous>, transform_indices = @transform_1, window_bounds = array<i64: 82, 64>}, {pipeline_mode = #tpu.pipeline_mode<synchronous>, transform_indices = @transform_2, window_bounds = array<i64: 1, 64>}, {pipeline_mode = #tpu.pipeline_mode<synchronous>, transform_indices = @transform_3, window_bounds = array<i64: 64, 32>}, {pipeline_mode = #tpu.pipeline_mode<synchronous>, transform_indices = @transform_4, window_bounds = array<i64: 1, 32>}, {transform_indices = @transform_5, window_bounds = array<i64: 32, 1>}, {transform_indices = @transform_6, window_bounds = array<i64: 32, 32>}]} {
    %c0 = arith.constant 0 : index
    %c0_0 = arith.constant 0 : index
    %0 = vector.load %arg1[%c0, %c0_0] : memref<32x82xf32, #tpu.memory_space<vmem>>, vector<32x82xf32>
    %c0_1 = arith.constant 0 : index
    %c0_2 = arith.constant 0 : index
    %1 = vector.load %arg2[%c0_1, %c0_2] : memref<82x64xf32, #tpu.memory_space<vmem>>, vector<82x64xf32>
    %cst = arith.constant dense<0.000000e+00> : vector<32x64xf32>
    %2 = tpu.matmul %0, %1, %cst {dimension_numbers = #tpu.dot_dimension_numbers<[1], [0], [0], [1], [0, 0, 1, 1], [], []>} : vector<32x82xf32>, vector<82x64xf32>, vector<32x64xf32> -> vector<32x64xf32>
    %c0_3 = arith.constant 0 : index
    %c0_4 = arith.constant 0 : index
    %3 = vector.load %arg3[%c0_3, %c0_4] : memref<1x64xf32, #tpu.memory_space<vmem>>, vector<1x64xf32>
    %4 = vector.broadcast %3 : vector<1x64xf32> to vector<32x64xf32>
    %5 = arith.addf %2, %4 : vector<32x64xf32>
    %cst_5 = arith.constant 0.000000e+00 : f32
    %6 = vector.broadcast %cst_5 : f32 to vector<32x64xf32>
    %7 = arith.maximumf %5, %6 : vector<32x64xf32>
    %c0_6 = arith.constant 0 : index
    %c0_7 = arith.constant 0 : index
    %8 = vector.load %arg4[%c0_6, %c0_7] : memref<64x32xf32, #tpu.memory_space<vmem>>, vector<64x32xf32>
    %cst_8 = arith.constant dense<0.000000e+00> : vector<32x32xf32>
    %9 = tpu.matmul %7, %8, %cst_8 {dimension_numbers = #tpu.dot_dimension_numbers<[1], [0], [0], [1], [0, 0, 1, 1], [], []>} : vector<32x64xf32>, vector<64x32xf32>, vector<32x32xf32> -> vector<32x32xf32>
    %c0_9 = arith.constant 0 : index
    %c0_10 = arith.constant 0 : index
    %10 = vector.load %arg5[%c0_9, %c0_10] : memref<1x32xf32, #tpu.memory_space<vmem>>, vector<1x32xf32>
    %11 = vector.broadcast %10 : vector<1x32xf32> to vector<32x32xf32>
    %12 = arith.addf %9, %11 : vector<32x32xf32>
    %cst_11 = arith.constant 0.000000e+00 : f32
    %13 = vector.broadcast %cst_11 : f32 to vector<32x32xf32>
    %14 = arith.maximumf %12, %13 : vector<32x32xf32>
    %c0_12 = arith.constant 0 : index
    %c0_13 = arith.constant 0 : index
    %15 = vector.load %arg6[%c0_12, %c0_13] : memref<32x1xbf16, #tpu.memory_space<vmem>>, vector<32x1xbf16>
    %16 = arith.extf %15 : vector<32x1xbf16> to vector<32x1xf32>
    %17 = vector.broadcast %16 : vector<32x1xf32> to vector<32x32xf32>
    %18 = arith.mulf %14, %17 : vector<32x32xf32>
    %c0_14 = arith.constant 0 : index
    %c0_15 = arith.constant 0 : index
    %19 = vector.load %arg7[%c0_14, %c0_15] : memref<32x32xf32, #tpu.memory_space<vmem>>, vector<32x32xf32>
    tpu.vector_store %arg7[%c0_14, %c0_15], %18 {strides = array<i32>} : memref<32x32xf32, #tpu.memory_space<vmem>>, vector<32x32xf32>,
    return
  }
  func.func @transform_0(%arg0: i32) -> (i32, i32) {
    %c0_i32 = arith.constant 0 : i32
    %c0_i32_0 = arith.constant 0 : i32
    return %arg0, %c0_i32 : i32, i32
  }
  func.func @transform_1(%arg0: i32) -> (i32, i32) {
    %c0_i32 = arith.constant 0 : i32
    %c0_i32_0 = arith.constant 0 : i32
    %c0_i32_1 = arith.constant 0 : i32
    return %c0_i32, %c0_i32_0 : i32, i32
  }
  func.func @transform_2(%arg0: i32) -> (i32, i32) {
    %c0_i32 = arith.constant 0 : i32
    %c0_i32_0 = arith.constant 0 : i32
    %c0_i32_1 = arith.constant 0 : i32
    return %c0_i32, %c0_i32_0 : i32, i32
  }
  func.func @transform_3(%arg0: i32) -> (i32, i32) {
    %c0_i32 = arith.constant 0 : i32
    %c0_i32_0 = arith.constant 0 : i32
    %c0_i32_1 = arith.constant 0 : i32
    return %c0_i32, %c0_i32_0 : i32, i32
  }
  func.func @transform_4(%arg0: i32) -> (i32, i32) {
    %c0_i32 = arith.constant 0 : i32
    %c0_i32_0 = arith.constant 0 : i32
    %c0_i32_1 = arith.constant 0 : i32
    return %c0_i32, %c0_i32_0 : i32, i32
  }
  func.func @transform_5(%arg0: i32) -> (i32, i32) {
    %c0_i32 = arith.constant 0 : i32
    %c0_i32_0 = arith.constant 0 : i32
    return %arg0, %c0_i32 : i32, i32
  }
  func.func @transform_6(%arg0: i32) -> (i32, i32) {
    %c0_i32 = arith.constant 0 : i32
    %c0_i32_0 = arith.constant 0 : i32
    return %arg0, %c0_i32 : i32, i32
  }
}

</mosaic_0001>

<llo_original>
// kernel: embed_edge_forward.1
$region0: #{embed_edge_forward.1}
  #allocation0 [shape = 'u32[]', space=smem, size = 0x4, offset = 0x4, fixed_abs, tag = 'smem constant byte address 0x4 - core index']
  #allocation1 [shape = 'u32[144,128]{1,0:T(1,128)}', space=vmem, size = 0x12000, scoped, tag = 'internal scratch']
  %s0 = inlined_call_operand.vmem [shape: f32[250,82], index: 0, kind: input, shape index: {}]
  %s1 = inlined_call_operand.vmem [shape: f32[82,64], index: 1, kind: input, shape index: {}]
  %s2 = inlined_call_operand.vmem [shape: f32[1,64], index: 2, kind: input, shape index: {}]
  %s3 = inlined_call_operand.vmem [shape: f32[64,32], index: 3, kind: input, shape index: {}]
  %s4 = inlined_call_operand.vmem [shape: f32[1,32], index: 4, kind: input, shape index: {}]
  %s5 = inlined_call_operand.vmem [shape: bf16[250,1], index: 5, kind: input, shape index: {}]
  %s6 = inlined_call_operand.vmem [shape: f32[250,32], index: 6, kind: output, shape index: {}]
  %s7 = sld [smem:[#allocation0]]
  $region57: #{embed_edge_forward.1} parent=0
    _
  %s9 = ssub.s32 1, %s7
  %s10 = scalar_select 0, %s9, %s7
  loop: start=0, step=1, limit=10
  $region2: #{embed_edge_forward.1} parent=0 // loop_pre_header
    _
  $region3: #{embed_edge_forward.1} parent=0 // loop_header
    %s12 = sphi 0, %s16
    %p13 = scmp.ge.s32.totalorder %s12, 10
    %s22 = sphi 0, %s24
    %s25 = sphi 0, %s22
    %s26 = sphi 0, %s25
    %s42 = sphi 0, %s26
    %s46 = sphi 0, %s46
    %s48 = sphi 0, %s46
    %s49 = sphi 0, %s48
    %s63 = sphi 0, %s49
    %s67 = sphi 0, %s67
    %s69 = sphi 0, %s67
    %s70 = sphi 0, %s69
    %s84 = sphi 0, %s70
    %s88 = sphi 0, %s88
    %s90 = sphi 0, %s88
    %s91 = sphi 0, %s90
    %s105 = sphi 0, %s91
    %s109 = sphi 0, %s109
    %s111 = sphi 0, %s109
    %s112 = sphi 0, %s111
    %s126 = sphi 0, %s112
    %s132 = sphi 0, %s134
    %s135 = sphi 0, %s132
    %s136 = sphi 0, %s135
    %s152 = sphi 0, %s136
    %s158 = sphi 0, %s160
    %s161 = sphi 0, %s158
    %s162 = sphi 0, %s161
    %s178 = sphi 0, %s162
  $region4: #{embed_edge_forward.1} parent=0 // loop_header_branch
    %15 = sbr.rel (%p13) target = $region8
  $region5: #{embed_edge_forward.1} parent=0 // loop_body
    %s17 = ssub.s32 %s12, 1
    %s18 = ssub.s32 %s12, 2
    %s19 = sadd.s32 %s12, 1
    %s20 = ssub.s32 %s12, %s19
    %p21 = scmp.eq.s32.totalorder %s20, 0
    %s23 = sadd.s32 %s22, 1
    %s24 = scalar_select %p21, %s22, %s23
    %p27 = pneg %p21
    %p28 = scmp.eq.s32.totalorder %s12, 7
    %p29 = por %p27, %p28
    %p30 = scmp.ne.s32.totalorder %s22, %s25
    %p31 = scmp.eq.s32.totalorder %s12, 0
    %p32 = por %p30, %p31
    %p33 = scmp.ne.s32.totalorder %s22, %s25
    %p34 = scmp.eq.s32.totalorder %s17, 7
    %p35 = por %p33, %p34
    %p36 = scmp.ne.s32.totalorder %s25, %s26
    %p37 = scmp.eq.s32.totalorder %s17, 0
    %p38 = por %p36, %p37
    %p39 = scmp.ne.s32.totalorder %s25, %s26
    %p40 = scmp.eq.s32.totalorder %s18, 7
    %p41 = por %p39, %p40
    %p43 = scmp.ne.s32.totalorder %s26, %s42
    %p44 = scmp.eq.s32.totalorder %s18, 0
    %p45 = por %p43, %p44
    %s47 = sadd.s32 %s46, 1
    %p50 = scmp.eq.s32.totalorder %s12, 7
    %p51 = scmp.ne.s32.totalorder %s46, %s48
    %p52 = scmp.eq.s32.totalorder %s12, 0
    %p53 = por %p51, %p52
    %p54 = scmp.ne.s32.totalorder %s46, %s48
    %p55 = scmp.eq.s32.totalorder %s17, 7
    %p56 = por %p54, %p55
    %p57 = scmp.ne.s32.totalorder %s48, %s49
    %p58 = scmp.eq.s32.totalorder %s17, 0
    %p59 = por %p57, %p58
    %p60 = scmp.ne.s32.totalorder %s48, %s49
    %p61 = scmp.eq.s32.totalorder %s18, 7
    %p62 = por %p60, %p61
    %p64 = scmp.ne.s32.totalorder %s49, %s63
    %p65 = scmp.eq.s32.totalorder %s18, 0
    %p66 = por %p64, %p65
    %s68 = sadd.s32 %s67, 1
    %p71 = scmp.eq.s32.totalorder %s12, 7
    %p72 = scmp.ne.s32.totalorder %s67, %s69
    %p73 = scmp.eq.s32.totalorder %s12, 0
    %p74 = por %p72, %p73
    %p75 = scmp.ne.s32.totalorder %s67, %s69
    %p76 = scmp.eq.s32.totalorder %s17, 7
    %p77 = por %p75, %p76
    %p78 = scmp.ne.s32.totalorder %s69, %s70
    %p79 = scmp.eq.s32.totalorder %s17, 0
    %p80 = por %p78, %p79
    %p81 = scmp.ne.s32.totalorder %s69, %s70
    %p82 = scmp.eq.s32.totalorder %s18, 7
    %p83 = por %p81, %p82
    %p85 = scmp.ne.s32.totalorder %s70, %s84
    %p86 = scmp.eq.s32.totalorder %s18, 0
    %p87 = por %p85, %p86
    %s89 = sadd.s32 %s88, 1
    %p92 = scmp.eq.s32.totalorder %s12, 7
    %p93 = scmp.ne.s32.totalorder %s88, %s90
    %p94 = scmp.eq.s32.totalorder %s12, 0
    %p95 = por %p93, %p94
    %p96 = scmp.ne.s32.totalorder %s88, %s90
    %p97 = scmp.eq.s32.totalorder %s17, 7
    %p98 = por %p96, %p97
    %p99 = scmp.ne.s32.totalorder %s90, %s91
    %p100 = scmp.eq.s32.totalorder %s17, 0
    %p101 = por %p99, %p100
    %p102 = scmp.ne.s32.totalorder %s90, %s91
    %p103 = scmp.eq.s32.totalorder %s18, 7
    %p104 = por %p102, %p103
    %p106 = scmp.ne.s32.totalorder %s91, %s105
    %p107 = scmp.eq.s32.totalorder %s18, 0
    %p108 = por %p106, %p107
    %s110 = sadd.s32 %s109, 1
    %p113 = scmp.eq.s32.totalorder %s12, 7
    %p114 = scmp.ne.s32.totalorder %s109, %s111
    %p115 = scmp.eq.s32.totalorder %s12, 0
    %p116 = por %p114, %p115
    %p117 = scmp.ne.s32.totalorder %s109, %s111
    %p118 = scmp.eq.s32.totalorder %s17, 7
    %p119 = por %p117, %p118
    %p120 = scmp.ne.s32.totalorder %s111, %s112
    %p121 = scmp.eq.s32.totalorder %s17, 0
    %p122 = por %p120, %p121
    %p123 = scmp.ne.s32.totalorder %s111, %s112
    %p124 = scmp.eq.s32.totalorder %s18, 7
    %p125 = por %p123, %p124
    %p127 = scmp.ne.s32.totalorder %s112, %s126
    %p128 = scmp.eq.s32.totalorder %s18, 0
    %p129 = por %p127, %p128
    %s130 = ssub.s32 %s12, %s19
    %p131 = scmp.eq.s32.totalorder %s130, 0
    %s133 = sadd.s32 %s132, 1
    %s134 = scalar_select %p131, %s132, %s133
    %p137 = pneg %p131
    %p138 = scmp.eq.s32.totalorder %s12, 7
    %p139 = por %p137, %p138
    %p140 = scmp.ne.s32.totalorder %s132, %s135
    %p141 = scmp.eq.s32.totalorder %s12, 0
    %p142 = por %p140, %p141
    %p143 = scmp.ne.s32.totalorder %s132, %s135
    %p144 = scmp.eq.s32.totalorder %s17, 7
    %p145 = por %p143, %p144
    %p146 = scmp.ne.s32.totalorder %s135, %s136
    %p147 = scmp.eq.s32.totalorder %s17, 0
    %p148 = por %p146, %p147
    %p149 = scmp.ne.s32.totalorder %s135, %s136
    %p150 = scmp.eq.s32.totalorder %s18, 7
    %p151 = por %p149, %p150
    %p153 = scmp.ne.s32.totalorder %s136, %s152
    %p154 = scmp.eq.s32.totalorder %s18, 0
    %p155 = por %p153, %p154
    %s156 = ssub.s32 %s12, %s19
    %p157 = scmp.eq.s32.totalorder %s156, 0
    %s159 = sadd.s32 %s158, 1
    %s160 = scalar_select %p157, %s158, %s159
    %p163 = pneg %p157
    %p164 = scmp.eq.s32.totalorder %s12, 7
    %p165 = por %p163, %p164
    %p166 = scmp.ne.s32.totalorder %s158, %s161
    %p167 = scmp.eq.s32.totalorder %s12, 0
    %p168 = por %p166, %p167
    %p169 = scmp.ne.s32.totalorder %s158, %s161
    %p170 = scmp.eq.s32.totalorder %s17, 7
    %p171 = por %p169, %p170
    %p172 = scmp.ne.s32.totalorder %s161, %s162
    %p173 = scmp.eq.s32.totalorder %s17, 0
    %p174 = por %p172, %p173
    %p175 = scmp.ne.s32.totalorder %s161, %s162
    %p176 = scmp.eq.s32.totalorder %s18, 7
    %p177 = por %p175, %p176
    %p179 = scmp.ne.s32.totalorder %s162, %s178
    %p180 = scmp.eq.s32.totalorder %s18, 0
    %p181 = por %p179, %p180
    %p182 = scmp.le.s32.totalorder 1, %s12
    %p183 = scmp.lt.s32.totalorder %s12, 9
    %p184 = pnand %p182, %p183
    %p185 = pneg %p184
    // Predicated region
    $region9: #{embed_edge_forward.1} parent=5 // pred_check
      _
    $region10: #{embed_edge_forward.1} parent=5 // pred_check_branch
      %187 = sbr.rel (%p184) target = $region12
    $region11: #{embed_edge_forward.1} parent=5 // pred_region
      %s188 = ssub.s32 %s12, 1
      // Predicated region
      $region13: #{embed_edge_forward.1} parent=11 // pred_check
        %p189 = pneg %p59
      $region14: #{embed_edge_forward.1} parent=11 // pred_check_branch
        %191 = sbr.rel (%p189) target = $region16
      $region15: #{embed_edge_forward.1} parent=11 // pred_region
        _
      $region16: #{embed_edge_forward.1} parent=11 // pred_fallthru
        _
      // Predicated region
      $region17: #{embed_edge_forward.1} parent=11 // pred_check
        %p192 = pneg %p80
      $region18: #{embed_edge_forward.1} parent=11 // pred_check_branch
        %194 = sbr.rel (%p192) target = $region20
      $region19: #{embed_edge_forward.1} parent=11 // pred_region
        _
      $region20: #{embed_edge_forward.1} parent=11 // pred_fallthru
        _
      // Predicated region
      $region21: #{embed_edge_forward.1} parent=11 // pred_check
        %p195 = pneg %p101
      $region22: #{embed_edge_forward.1} parent=11 // pred_check_branch
        %197 = sbr.rel (%p195) target = $region24
      $region23: #{embed_edge_forward.1} parent=11 // pred_region
        _
      $region24: #{embed_edge_forward.1} parent=11 // pred_fallthru
        _
      // Predicated region
      $region25: #{embed_edge_forward.1} parent=11 // pred_check
        %p198 = pneg %p122
      $region26: #{embed_edge_forward.1} parent=11 // pred_check_branch
        %200 = sbr.rel (%p198) target = $region28
      $region27: #{embed_edge_forward.1} parent=11 // pred_region
        _
      $region28: #{embed_edge_forward.1} parent=11 // pred_fallthru
        _
    $region12: #{embed_edge_forward.1} parent=5 // pred_fallthru
      _
    %p201 = scmp.lt.s32.totalorder %s12, 8
    // Predicated region
    $region29: #{embed_edge_forward.1} parent=5 // pred_check
      %p202 = pneg %p201
    $region30: #{embed_edge_forward.1} parent=5 // pred_check_branch
      %204 = sbr.rel (%p202) target = $region32
    $region31: #{embed_edge_forward.1} parent=5 // pred_region
      // Predicated region
      $region33: #{embed_edge_forward.1} parent=31 // pred_check
        %p205 = pneg %p32
      $region34: #{embed_edge_forward.1} parent=31 // pred_check_branch
        %207 = sbr.rel (%p205) target = $region36
      $region35: #{embed_edge_forward.1} parent=31 // pred_region
        %s208 = smul.u32 4, %s12
        %p209 = scmp.lt.s32.totalorder %s208, 31
        %s210 = scalar_select %p209, %s208, 31
        %s211 = smul.addr %s210, 8
        %s212 = scalar_lea.vmem %s0, %s211
        %s213 = smul.u32 4, %s12
      $region36: #{embed_edge_forward.1} parent=31 // pred_fallthru
        _
      // Predicated region
      $region37: #{embed_edge_forward.1} parent=31 // pred_check
        %p214 = pneg %p142
      $region38: #{embed_edge_forward.1} parent=31 // pred_check_branch
        %216 = sbr.rel (%p214) target = $region40
      $region39: #{embed_edge_forward.1} parent=31 // pred_region
        %s217 = smul.u32 4, %s12
        %p218 = scmp.lt.s32.totalorder %s217, 31
        %s219 = scalar_select %p218, %s217, 31
        %s220 = smul.addr %s219, 4
        %s221 = scalar_lea.vmem %s5, %s220
        %s222 = smul.u32 4, %s12
      $region40: #{embed_edge_forward.1} parent=31 // pred_fallthru
        _
    $region32: #{embed_edge_forward.1} parent=5 // pred_fallthru
      _
    %p223 = scmp.le.s32.totalorder 1, %s12
    %p224 = scmp.lt.s32.totalorder %s12, 9
    %p225 = pnand %p223, %p224
    %p226 = pneg %p225
    // Predicated region
    $region41: #{embed_edge_forward.1} parent=5 // pred_check
      _
    $region42: #{embed_edge_forward.1} parent=5 // pred_check_branch
      %228 = sbr.rel (%p225) target = $region44
    $region43: #{embed_edge_forward.1} parent=5 // pred_region
      %s229 = ssub.s32 %s12, 1
      %s230 = smul.u32 4, %s17
      %p231 = scmp.lt.s32.totalorder %s230, 31
      %s232 = scalar_select %p231, %s230, 31
      %s233 = smul.addr %s232, 8
      %s234 = scalar_lea.vmem %s0, %s233
      %p235 = pneg %p38
      %p236 = pneg %p35
      %p237 = pneg %p59
      %p238 = pneg %p56
      %p239 = pneg %p80
      %p240 = pneg %p77
      %p241 = pneg %p101
      %p242 = pneg %p98
      %p243 = pneg %p122
      %p244 = pneg %p119
      %s245 = smul.u32 4, %s17
      %p246 = scmp.lt.s32.totalorder %s245, 31
      %s247 = scalar_select %p246, %s245, 31
      %s248 = smul.addr %s247, 4
      %s249 = scalar_lea.vmem %s5, %s248
      %p250 = pneg %p148
      %p251 = pneg %p145
      %p252 = pneg %p174
      %p253 = pneg %p171
      %s254 = smul.u32 4, %s17
      %p255 = scmp.lt.s32.totalorder %s254, 31
      %s256 = scalar_select %p255, %s254, 31
      %s257 = smul.addr %s256, 8
      %s258 = scalar_lea.vmem %s6, %s257
      %s259 = smul.u32 4, %s17
      %p260 = scmp.lt.s32.totalorder %s259, 31
      %s261 = scalar_select %p260, %s259, 31
      %s262 = smul.addr %s261, 8
      %s263 = scalar_lea.vmem %s0, %s262
      %s264 = smul.u32 4, %s17
      %s265 = smul.u32 4, %s17
      %p266 = scmp.lt.s32.totalorder %s265, 31
      %s267 = scalar_select %p266, %s265, 31
      %s268 = smul.addr %s267, 4
      %s269 = scalar_lea.vmem %s5, %s268
      %s270 = smul.u32 4, %s17
      %s271 = smul.u32 4, %s17
      %p272 = scmp.lt.s32.totalorder %s271, 31
      %s273 = scalar_select %p272, %s271, 31
      %s274 = smul.addr %s273, 8
      %s275 = scalar_lea.vmem %s6, %s274
      %s276 = smul.u32 4, %s17
      %v277 = vld [vmem:[%s263] sm:$0xff]
      %v278 = vld [vmem:[%s263 + $0x8] sm:$0xff]
      %v279 = vld [vmem:[%s263 + $0x10] sm:$0xff]
      %v280 = vld [vmem:[%s263 + $0x18] sm:$0xff]
      %v281 = vld [vmem:[%s1] sm:$0xff]
      %v282 = vld [vmem:[%s1 + $0x8] sm:$0xff]
      %v283 = vld [vmem:[%s1 + $0x10] sm:$0xff]
      %v284 = vld [vmem:[%s1 + $0x18] sm:$0xff]
      %v285 = vld [vmem:[%s1 + $0x20] sm:$0xff]
      %v286 = vld [vmem:[%s1 + $0x28] sm:$0xff]
      %v287 = vld [vmem:[%s1 + $0x30] sm:$0xff]
      %v288 = vld [vmem:[%s1 + $0x38] sm:$0xff]
      %v289 = vld [vmem:[%s1 + $0x40] sm:$0xff]
      %v290 = vld [vmem:[%s1 + $0x48] sm:$0xff]
      %v291 = vld [vmem:[%s1 + $0x50] sm:$0x3]
      %v292 = vld [vmem:[%s2] sm:$0x1]
      %v294 = vlaneseq
      %v295 = vshrl.u32 %v294, 7
      %v296 = vsub.s32 0, %v295
      %v297 = vrot.slane %v292, %v296
      %vm299 = vcmask 670720
      %v301 = vsel %vm299, %v277, 0
      %v304 = vsel %vm299, %v278, 0
      %v307 = vsel %vm299, %v279, 0
      %v310 = vsel %vm299, %v280, 0
      %vm312 = vcmask 1041408
      %v314 = vsel %vm312, %v291, 0
      %316 = vmatprep.subr.mxu0 0.0
      %317 = vmatpush1.msra.mxu0 0.0
      %318 = vmatprep.subr.mxu0 0.0
      %319 = vmatpush1.msra.mxu0 0.0
      %320 = vmatprep.subr.mxu0 0.0
      %321 = vmatpush1.msra.mxu0 0.0
      %322 = vmatprep.subr.mxu0 0.0
      %323 = vmatpush1.msra.mxu0 0.0
      %324 = vmatprep.subr.mxu0 0.0
      %325 = vmatpush1.msra.mxu0 0.0
      %326 = vmatprep.subr.mxu0 0.0
      %327 = vmatpush1.msra.mxu0 %v314
      %328 = vmatprep.subr.mxu0 0.0
      %329 = vmatpush1.msra.mxu0 %v290
      %330 = vmatprep.subr.mxu0 0.0
      %331 = vmatpush1.msra.mxu0 %v289
      %332 = vmatprep.subr.mxu0 0.0
      %333 = vmatpush1.msra.mxu0 %v288
      %334 = vmatprep.subr.mxu0 0.0
      %335 = vmatpush1.msra.mxu0 %v287
      %336 = vmatprep.subr.mxu0 0.0
      %337 = vmatpush1.msra.mxu0 %v286
      %338 = vmatprep.subr.mxu0 0.0
      %339 = vmatpush1.msra.mxu0 %v285
      %340 = vmatprep.subr.mxu0 0.0
      %341 = vmatpush1.msra.mxu0 %v284
      %342 = vmatprep.subr.mxu0 0.0
      %343 = vmatpush1.msra.mxu0 %v283
      %344 = vmatprep.subr.mxu0 0.0
      %345 = vmatpush1.msra.mxu0 %v282
      %346 = vmatprep.subr.mxu0 0.0
      %347 = vmatpush1.msra.mxu0 %v281
      %348 = vmatprep.subr.mxu0 0.0
      %349 = vmatpush2.msra.mxu0 0.0
      %350 = vmatprep.subr.mxu0 0.0
      %351 = vmatpush2.msra.mxu0 0.0
      %352 = vmatprep.subr.mxu0 0.0
      %353 = vmatpush2.msra.mxu0 0.0
      %354 = vmatprep.subr.mxu0 0.0
      %355 = vmatpush2.msra.mxu0 0.0
      %356 = vmatprep.subr.mxu0 0.0
      %357 = vmatpush2.msra.mxu0 0.0
      %358 = vmatprep.subr.mxu0 0.0
      %359 = vmatpush2.msra.mxu0 0.0
      %360 = vmatprep.subr.mxu0 0.0
      %361 = vmatpush2.msra.mxu0 0.0
      %362 = vmatprep.subr.mxu0 0.0
      %363 = vmatpush2.msra.mxu0 0.0
      %364 = vmatprep.subr.mxu0 0.0
      %365 = vmatpush2.msra.mxu0 0.0
      %366 = vmatprep.subr.mxu0 0.0
      %367 = vmatpush2.msra.mxu0 0.0
      %368 = vmatprep.subr.mxu0 0.0
      %369 = vmatpush2.msra.mxu0 0.0
      %370 = vmatprep.subr.mxu0 0.0
      %371 = vmatpush2.msra.mxu0 0.0
      %372 = vmatprep.subr.mxu0 0.0
      %373 = vmatpush2.msra.mxu0 0.0
      %374 = vmatprep.subr.mxu0 0.0
      %375 = vmatpush2.msra.mxu0 0.0
      %376 = vmatprep.subr.mxu0 0.0
      %377 = vmatpush2.msra.mxu0 0.0
      %378 = vmatprep.subr.mxu0 0.0
      %379 = vmatpush2.msra.mxu0 0.0
      %380 = vmatprep.mubr.f32.mxu0 0.0
      %381 = vmatmul.mubr.f32.gmra.mxu0 %v301
      %v382 = vpop.f32.mrf.mxu0
      %v383 = vadd.f32 %v297, %v382
      %v384 = vpop.f32.mrf.mxu0
      %385 = vmatprep.mubr.f32.mxu0 0.0
      %386 = vmatmul.mubr.f32.gmra.mxu0 %v304
      %v387 = vpop.f32.mrf.mxu0
      %v388 = vadd.f32 %v297, %v387
      %v389 = vpop.f32.mrf.mxu0
      %390 = vmatprep.mubr.f32.mxu0 0.0
      %391 = vmatmul.mubr.f32.gmra.mxu0 %v307
      %v392 = vpop.f32.mrf.mxu0
      %v393 = vadd.f32 %v297, %v392
      %v394 = vpop.f32.mrf.mxu0
      %395 = vmatprep.mubr.f32.mxu0 0.0
      %396 = vmatmul.mubr.f32.gmra.mxu0 %v310
      %v397 = vpop.f32.mrf.mxu0
      %v398 = vadd.f32 %v297, %v397
      %v399 = vpop.f32.mrf.mxu0
      %400 = vdwg.mxu0
      %v401 = vmax.f32 %v383, 0.0
      %v402 = vmax.f32 %v388, 0.0
      %v403 = vmax.f32 %v393, 0.0
      %v404 = vmax.f32 %v398, 0.0
      %v405 = vld [vmem:[%s3] sm:$0xff]
      %v406 = vld [vmem:[%s3 + $0x8] sm:$0xff]
      %v407 = vld [vmem:[%s3 + $0x10] sm:$0xff]
      %v408 = vld [vmem:[%s3 + $0x18] sm:$0xff]
      %v409 = vld [vmem:[%s3 + $0x20] sm:$0xff]
      %v410 = vld [vmem:[%s3 + $0x28] sm:$0xff]
      %v411 = vld [vmem:[%s3 + $0x30] sm:$0xff]
      %v412 = vld [vmem:[%s3 + $0x38] sm:$0xff]
      %v413 = vld [vmem:[%s4] sm:$0x1]
      %v415 = vlaneseq
      %v416 = vshrl.u32 %v415, 7
      %v417 = vsub.s32 0, %v416
      %v418 = vrot.slane %v413, %v417
      %vm420 = vcmask 523264
      %v422 = vsel %vm420, %v401, 0
      %v425 = vsel %vm420, %v402, 0
      %v428 = vsel %vm420, %v403, 0
      %v431 = vsel %vm420, %v404, 0
      %433 = vmatprep.subr.mxu0 0.0
      %434 = vmatpush1.msra.mxu0 0.0
      %435 = vmatprep.subr.mxu0 0.0
      %436 = vmatpush1.msra.mxu0 0.0
      %437 = vmatprep.subr.mxu0 0.0
      %438 = vmatpush1.msra.mxu0 0.0
      %439 = vmatprep.subr.mxu0 0.0
      %440 = vmatpush1.msra.mxu0 0.0
      %441 = vmatprep.subr.mxu0 0.0
      %442 = vmatpush1.msra.mxu0 0.0
      %443 = vmatprep.subr.mxu0 0.0
      %444 = vmatpush1.msra.mxu0 0.0
      %445 = vmatprep.subr.mxu0 0.0
      %446 = vmatpush1.msra.mxu0 0.0
      %447 = vmatprep.subr.mxu0 0.0
      %448 = vmatpush1.msra.mxu0 0.0
      %449 = vmatprep.subr.mxu0 0.0
      %450 = vmatpush1.msra.mxu0 %v412
      %451 = vmatprep.subr.mxu0 0.0
      %452 = vmatpush1.msra.mxu0 %v411
      %453 = vmatprep.subr.mxu0 0.0
      %454 = vmatpush1.msra.mxu0 %v410
      %455 = vmatprep.subr.mxu0 0.0
      %456 = vmatpush1.msra.mxu0 %v409
      %457 = vmatprep.subr.mxu0 0.0
      %458 = vmatpush1.msra.mxu0 %v408
      %459 = vmatprep.subr.mxu0 0.0
      %460 = vmatpush1.msra.mxu0 %v407
      %461 = vmatprep.subr.mxu0 0.0
      %462 = vmatpush1.msra.mxu0 %v406
      %463 = vmatprep.subr.mxu0 0.0
      %464 = vmatpush1.msra.mxu0 %v405
      %465 = vmatprep.subr.mxu0 0.0
      %466 = vmatpush2.msra.mxu0 0.0
      %467 = vmatprep.subr.mxu0 0.0
      %468 = vmatpush2.msra.mxu0 0.0
      %469 = vmatprep.subr.mxu0 0.0
      %470 = vmatpush2.msra.mxu0 0.0
      %471 = vmatprep.subr.mxu0 0.0
      %472 = vmatpush2.msra.mxu0 0.0
      %473 = vmatprep.subr.mxu0 0.0
      %474 = vmatpush2.msra.mxu0 0.0
      %475 = vmatprep.subr.mxu0 0.0
      %476 = vmatpush2.msra.mxu0 0.0
      %477 = vmatprep.subr.mxu0 0.0
      %478 = vmatpush2.msra.mxu0 0.0
      %479 = vmatprep.subr.mxu0 0.0
      %480 = vmatpush2.msra.mxu0 0.0
      %481 = vmatprep.subr.mxu0 0.0
      %482 = vmatpush2.msra.mxu0 0.0
      %483 = vmatprep.subr.mxu0 0.0
      %484 = vmatpush2.msra.mxu0 0.0
      %485 = vmatprep.subr.mxu0 0.0
      %486 = vmatpush2.msra.mxu0 0.0
      %487 = vmatprep.subr.mxu0 0.0
      %488 = vmatpush2.msra.mxu0 0.0
      %489 = vmatprep.subr.mxu0 0.0
      %490 = vmatpush2.msra.mxu0 0.0
      %491 = vmatprep.subr.mxu0 0.0
      %492 = vmatpush2.msra.mxu0 0.0
      %493 = vmatprep.subr.mxu0 0.0
      %494 = vmatpush2.msra.mxu0 0.0
      %495 = vmatprep.subr.mxu0 0.0
      %496 = vmatpush2.msra.mxu0 0.0
      %497 = vmatprep.mubr.f32.mxu0 0.0
      %498 = vmatmul.mubr.f32.gmra.mxu0 %v422
      %v499 = vpop.f32.mrf.mxu0
      %v500 = vadd.f32 %v418, %v499
      %v501 = vpop.f32.mrf.mxu0
      %502 = vmatprep.mubr.f32.mxu0 0.0
      %503 = vmatmul.mubr.f32.gmra.mxu0 %v425
      %v504 = vpop.f32.mrf.mxu0
      %v505 = vadd.f32 %v418, %v504
      %v506 = vpop.f32.mrf.mxu0
      %507 = vmatprep.mubr.f32.mxu0 0.0
      %508 = vmatmul.mubr.f32.gmra.mxu0 %v428
      %v509 = vpop.f32.mrf.mxu0
      %v510 = vadd.f32 %v418, %v509
      %v511 = vpop.f32.mrf.mxu0
      %512 = vmatprep.mubr.f32.mxu0 0.0
      %513 = vmatmul.mubr.f32.gmra.mxu0 %v431
      %v514 = vpop.f32.mrf.mxu0
      %v515 = vadd.f32 %v418, %v514
      %v516 = vpop.f32.mrf.mxu0
      %517 = vdwg.mxu0
      %v518 = vmax.f32 %v500, 0.0
      %v519 = vmax.f32 %v505, 0.0
      %v520 = vmax.f32 %v510, 0.0
      %v521 = vmax.f32 %v515, 0.0
      %v522 = vld [vmem:[%s269] sm:$0xf]
      %v523 = vld [vmem:[%s269 + $0x4] sm:$0xf]
      %v524 = vld [vmem:[%s269 + $0x8] sm:$0xf]
      %v525 = vld [vmem:[%s269 + $0xc] sm:$0xf]
      %v526 = vunpack.c.l.bf16 %v522
      %v527 = vunpack.c.l.bf16 %v523
      %v528 = vunpack.c.l.bf16 %v524
      %v529 = vunpack.c.l.bf16 %v525
      %531 = vset.pattern.permute.xlu0 0
      %532 = vperm.xlu0 %531, %v526
      %v533 = vpop.permute.xlu0 %532
      %536 = vset.pattern.permute.xlu0 0
      %537 = vperm.xlu0 %536, %v527
      %v538 = vpop.permute.xlu0 %537
      %541 = vset.pattern.permute.xlu0 0
      %542 = vperm.xlu0 %541, %v528
      %v543 = vpop.permute.xlu0 %542
      %546 = vset.pattern.permute.xlu0 0
      %547 = vperm.xlu0 %546, %v529
      %v548 = vpop.permute.xlu0 %547
      %v550 = vmul.f32 %v518, %v533
      %v551 = vmul.f32 %v519, %v538
      %v552 = vmul.f32 %v520, %v543
      %v553 = vmul.f32 %v521, %v548
      %vm554 = vcmask 261120
      %555 = vst.msk [vmem:[%s275] sm:$0xff] %vm554, %v550
      %556 = vst.msk [vmem:[%s275 + $0x8] sm:$0xff] %vm554, %v551
      %557 = vst.msk [vmem:[%s275 + $0x10] sm:$0xff] %vm554, %v552
      %558 = vst.msk [vmem:[%s275 + $0x18] sm:$0xff] %vm554, %v553
      %s559 = smul.u32 4, %s17
      %p560 = scmp.lt.s32.totalorder %s559, 31
      %s561 = scalar_select %p560, %s559, 31
      %s562 = smul.addr %s561, 8
      %s563 = scalar_lea.vmem %s6, %s562
      // Predicated region
      $region45: #{embed_edge_forward.1} parent=43 // pred_check
        %p564 = pneg %p171
      $region46: #{embed_edge_forward.1} parent=43 // pred_check_branch
        %566 = sbr.rel (%p564) target = $region48
      $region47: #{embed_edge_forward.1} parent=43 // pred_region
        %s567 = smul.u32 4, %s17
      $region48: #{embed_edge_forward.1} parent=43 // pred_fallthru
        _
    $region44: #{embed_edge_forward.1} parent=5 // pred_fallthru
      _
    %p568 = scmp.le.s32.totalorder 2, %s12
    // Predicated region
    $region49: #{embed_edge_forward.1} parent=5 // pred_check
      %p569 = pneg %p568
    $region50: #{embed_edge_forward.1} parent=5 // pred_check_branch
      %571 = sbr.rel (%p569) target = $region52
    $region51: #{embed_edge_forward.1} parent=5 // pred_region
      %s572 = ssub.s32 %s12, 2
      // Predicated region
      $region53: #{embed_edge_forward.1} parent=51 // pred_check
        %p573 = pneg %p177
      $region54: #{embed_edge_forward.1} parent=51 // pred_check_branch
        %575 = sbr.rel (%p573) target = $region56
      $region55: #{embed_edge_forward.1} parent=51 // pred_region
        %s576 = smul.u32 4, %s18
        %p577 = scmp.lt.s32.totalorder %s576, 31
        %s578 = scalar_select %p577, %s576, 31
        %s579 = smul.addr %s578, 8
        %s580 = scalar_lea.vmem %s6, %s579
      $region56: #{embed_edge_forward.1} parent=51 // pred_fallthru
        _
    $region52: #{embed_edge_forward.1} parent=5 // pred_fallthru
      _
  $region6: #{embed_edge_forward.1} parent=0 // loop_footer
    %s16 = sadd.s32 1, %s12
  $region7: #{embed_edge_forward.1} parent=0 // loop_footer_branch
    %11 = sbr.rel target = $region3
  $region8: #{embed_edge_forward.1} parent=0 // loop_exit
    _

</llo_original>
